<compile_context>
chip_gen: v5e
topology: v5e:2x2
jax: 0.10.0
libtpu: 0.0.40
codegen_flags: <defaults>
</compile_context>

<pallas_src>
import jax
import jax.numpy as jnp
import numpy as np
from jax.experimental import pallas as pl
from jax.experimental.pallas import tpu as pltpu  # noqa: F401  (TPU backend assumed)


LANE = 128     # lane (last-dim) granularity for unmasked vector stores
SUBLANE = 8    # sublane (second-to-last dim) granularity


def _rup(n, m):
    return ((n + m - 1) // m) * m


def _pad2(a, rows, cols):
    a = jnp.asarray(a, jnp.float32)
    r, c = a.shape
    return jnp.pad(a, ((0, rows - r), (0, cols - c)))


# ------------------------- fused Pallas kernel -------------------------

def gcn_fused_kernel(a_ref, p_ref, x_ref, w1_ref, b1_ref,
                     w2_ref, b2_ref, wfc_ref, bfc_ref, o_ref):
    """Entire GCN forward; intermediates stay in VMEM / vregs.

        h1  = relu((A @ X) @ W1 + b1)     # reordered: contract narrow Cin first
        h2  = relu(A @ (h1 @ W2) + b2)
        out = (P @ h2) @ Wfc + bfc        # global mean pool fused with fc
    """
    a = a_ref[...]

    # --- GCNConv 1 + ReLU ---
    ax = jnp.dot(a, x_ref[...], preferred_element_type=jnp.float32)
    h1 = jnp.maximum(
        jnp.dot(ax, w1_ref[...], preferred_element_type=jnp.float32) + b1_ref[...],
        0.0)

    # --- GCNConv 2 + ReLU ---
    hw = jnp.dot(h1, w2_ref[...], preferred_element_type=jnp.float32)
    h2 = jnp.maximum(
        jnp.dot(a, hw, preferred_element_type=jnp.float32) + b2_ref[...],
        0.0)

    # --- global mean pool + Linear ---
    pooled = jnp.dot(p_ref[...], h2, preferred_element_type=jnp.float32)
    o_ref[...] = (jnp.dot(pooled, wfc_ref[...], preferred_element_type=jnp.float32)
                  + bfc_ref[...]).astype(o_ref.dtype)


# ------------------------- wrapper -------------------------

def gcn_forward(params, x, a_norm, pool_mat):
    n, cin = x.shape
    g = pool_mat.shape[0]
    cout = params["w_fc"].shape[1]

    # padded (TPU-friendly) dims: lanes -> 128, sublanes -> 8
    n_p = _rup(n, LANE)        # N is also the lane dim of A and P
    g_p = _rup(g, SUBLANE)
    cin_p = _rup(cin, LANE)
    hid_p = _rup(params["w1"].shape[1], LANE)
    cout_p = _rup(cout, LANE)

    a_p = _pad2(a_norm, n_p, n_p)
    p_p = _pad2(pool_mat, g_p, n_p)
    x_p = _pad2(x, n_p, cin_p)
    w1_p = _pad2(params["w1"], cin_p, hid_p)
    w2_p = _pad2(params["w2"], hid_p, hid_p)
    wfc_p = _pad2(params["w_fc"], hid_p, cout_p)
    b1_p = _pad2(params["b1"].reshape(1, -1), 1, hid_p)
    b2_p = _pad2(params["b2"].reshape(1, -1), 1, hid_p)
    bfc_p = _pad2(params["b_fc"].reshape(1, -1), 1, cout_p)

    operands = (a_p, p_p, x_p, w1_p, b1_p, w2_p, b2_p, wfc_p, bfc_p)

    flops = 2 * (n_p * n_p * cin_p          # A @ X
                 + n_p * cin_p * hid_p      # (A@X) @ W1
                 + n_p * hid_p * hid_p      # h1 @ W2
                 + n_p * n_p * hid_p        # A @ (h1@W2)
                 + g_p * n_p * hid_p        # P @ h2
                 + g_p * hid_p * cout_p)    # pooled @ Wfc
    bytes_accessed = (sum(int(np.prod(o.shape)) for o in operands)
                      + g_p * cout_p) * 4

    def _full(shape):
        nd = len(shape)
        return pl.BlockSpec(shape, lambda i, _nd=nd: (0,) * _nd)

    out_p = pl.pallas_call(
        gcn_fused_kernel,
        out_shape=jax.ShapeDtypeStruct((g_p, cout_p), jnp.float32),
        grid=(1,),
        in_specs=[_full(o.shape) for o in operands],
        out_specs=_full((g_p, cout_p)),
        cost_estimate=pl.CostEstimate(flops=int(flops), transcendentals=0,
                                      bytes_accessed=int(bytes_accessed)),
    )(*operands)

    # strip the zero padding (padded graph rows / channel cols)
    return out_p[:g, :cout]


# ------------------------- graph preprocessing (host-side glue) -----------

def normalized_adjacency(edge_index, num_nodes):
    """Dense GCN-normalized adjacency: D^-1/2 (A + I) D^-1/2."""
    src, dst = np.asarray(edge_index)
    a = np.zeros((num_nodes, num_nodes), dtype=np.float32)
    a[dst, src] = 1.0                                   # row = target node
    a = a + np.eye(num_nodes, dtype=np.float32)         # self loops
    deg = a.sum(axis=1)
    dinv = 1.0 / np.sqrt(np.maximum(deg, 1.0))
    return jnp.asarray(dinv[:, None] * a * dinv[None, :])


def mean_pool_matrix(batch, num_graphs):
    """(num_graphs, num_nodes): P[g, i] = 1/|graph g| if batch[i] == g."""
    batch = np.asarray(batch)
    n = batch.shape[0]
    p = np.zeros((num_graphs, n), dtype=np.float32)
    for g in range(num_graphs):
        idx = np.where(batch == g)[0]
        if len(idx) > 0:
            p[g, idx] = 1.0 / len(idx)
    return jnp.asarray(p)


# ------------------------- main -------------------------

if __name__ == "__main__":
    in_channels, hidden_channels, out_channels = 4, 32, 8
    nodes_per_graph, num_graphs = 8, 2
    num_nodes = nodes_per_graph * num_graphs

    key = jax.random.PRNGKey(0)
    k1, k2, k3, k4, k5, k6, kx = jax.random.split(key, 7)
    params = {
        "w1": jax.random.normal(k1, (in_channels, hidden_channels), jnp.float32) * 0.2,
        "b1": jax.random.normal(k2, (hidden_channels,), jnp.float32) * 0.1,
        "w2": jax.random.normal(k3, (hidden_channels, hidden_channels), jnp.float32) * 0.2,
        "b2": jax.random.normal(k4, (hidden_channels,), jnp.float32) * 0.1,
        "w_fc": jax.random.normal(k5, (hidden_channels, out_channels), jnp.float32) * 0.2,
        "b_fc": jax.random.normal(k6, (out_channels,), jnp.float32) * 0.1,
    }

    # deterministic graphs: an undirected ring within each graph
    src, dst = [], []
    for g in range(num_graphs):
        base = g * nodes_per_graph
        for i in range(nodes_per_graph):
            j = (i + 1) % nodes_per_graph
            src += [base + i, base + j]
            dst += [base + j, base + i]
    edge_index = np.stack([np.array(src), np.array(dst)], axis=0)   # (2, E)
    batch = np.repeat(np.arange(num_graphs), nodes_per_graph)        # (N,)

    x = jax.random.normal(kx, (num_nodes, in_channels), jnp.float32)
    a_norm = normalized_adjacency(edge_index, num_nodes)
    pool_mat = mean_pool_matrix(batch, num_graphs)

    out = gcn_forward(params, x, a_norm, pool_mat)
    out = jax.block_until_ready(out)

    # pure-JAX reference (same math as the PyTorch module forward)
    def ref_forward(params, x, a_norm, pool_mat):
        h = jnp.maximum(a_norm @ (x @ params["w1"]) + params["b1"], 0.0)
        h = jnp.maximum(a_norm @ (h @ params["w2"]) + params["b2"], 0.0)
        pooled = pool_mat @ h
        return pooled @ params["w_fc"] + params["b_fc"]

    ref = ref_forward(params, x, a_norm, pool_mat)
    assert out.shape == (num_graphs, out_channels)
    np.testing.assert_allclose(np.asarray(out), np.asarray(ref), rtol=1e-5, atol=1e-5)

    print("KERNEL_OK")
</pallas_src>

<mosaic_0001>
module attributes {stable_mosaic.version = 11 : i64} {
  func.func @gcn_fused_kernel(%arg0: i32, %arg1: memref<128x128xf32, #tpu.memory_space<vmem>>, %arg2: memref<8x128xf32, #tpu.memory_space<vmem>>, %arg3: memref<128x128xf32, #tpu.memory_space<vmem>>, %arg4: memref<128x128xf32, #tpu.memory_space<vmem>>, %arg5: memref<1x128xf32, #tpu.memory_space<vmem>>, %arg6: memref<128x128xf32, #tpu.memory_space<vmem>>, %arg7: memref<1x128xf32, #tpu.memory_space<vmem>>, %arg8: memref<128x128xf32, #tpu.memory_space<vmem>>, %arg9: memref<1x128xf32, #tpu.memory_space<vmem>>, %arg10: memref<8x128xf32, #tpu.memory_space<vmem>>) attributes {dimension_semantics = [#tpu.dimension_semantics<arbitrary>], iteration_bounds = array<i64: 1>, scalar_prefetch = 0 : i64, scratch_operands = 0 : i64, tpu.core_type = #tpu.core_type<tc>, window_params = [{pipeline_mode = #tpu.pipeline_mode<synchronous>, transform_indices = @transform_0, window_bounds = array<i64: 128, 128>}, {pipeline_mode = #tpu.pipeline_mode<synchronous>, transform_indices = @transform_1, window_bounds = array<i64: 8, 128>}, {pipeline_mode = #tpu.pipeline_mode<synchronous>, transform_indices = @transform_2, window_bounds = array<i64: 128, 128>}, {pipeline_mode = #tpu.pipeline_mode<synchronous>, transform_indices = @transform_3, window_bounds = array<i64: 128, 128>}, {pipeline_mode = #tpu.pipeline_mode<synchronous>, transform_indices = @transform_4, window_bounds = array<i64: 1, 128>}, {pipeline_mode = #tpu.pipeline_mode<synchronous>, transform_indices = @transform_5, window_bounds = array<i64: 128, 128>}, {pipeline_mode = #tpu.pipeline_mode<synchronous>, transform_indices = @transform_6, window_bounds = array<i64: 1, 128>}, {pipeline_mode = #tpu.pipeline_mode<synchronous>, transform_indices = @transform_7, window_bounds = array<i64: 128, 128>}, {pipeline_mode = #tpu.pipeline_mode<synchronous>, transform_indices = @transform_8, window_bounds = array<i64: 1, 128>}, {pipeline_mode = #tpu.pipeline_mode<synchronous>, transform_indices = @transform_9, window_bounds = array<i64: 8, 128>}]} {
    %c0 = arith.constant 0 : index
    %c0_0 = arith.constant 0 : index
    %0 = vector.load %arg1[%c0, %c0_0] : memref<128x128xf32, #tpu.memory_space<vmem>>, vector<128x128xf32>
    %c0_1 = arith.constant 0 : index
    %c0_2 = arith.constant 0 : index
    %1 = vector.load %arg3[%c0_1, %c0_2] : memref<128x128xf32, #tpu.memory_space<vmem>>, vector<128x128xf32>
    %cst = arith.constant dense<0.000000e+00> : vector<128x128xf32>
    %2 = tpu.matmul %0, %1, %cst {dimension_numbers = #tpu.dot_dimension_numbers<[1], [0], [0], [1], [0, 0, 1, 1], [], []>} : vector<128x128xf32>, vector<128x128xf32>, vector<128x128xf32> -> vector<128x128xf32>
    %c0_3 = arith.constant 0 : index
    %c0_4 = arith.constant 0 : index
    %3 = vector.load %arg4[%c0_3, %c0_4] : memref<128x128xf32, #tpu.memory_space<vmem>>, vector<128x128xf32>
    %cst_5 = arith.constant dense<0.000000e+00> : vector<128x128xf32>
    %4 = tpu.matmul %2, %3, %cst_5 {dimension_numbers = #tpu.dot_dimension_numbers<[1], [0], [0], [1], [0, 0, 1, 1], [], []>} : vector<128x128xf32>, vector<128x128xf32>, vector<128x128xf32> -> vector<128x128xf32>
    %c0_6 = arith.constant 0 : index
    %c0_7 = arith.constant 0 : index
    %5 = vector.load %arg5[%c0_6, %c0_7] : memref<1x128xf32, #tpu.memory_space<vmem>>, vector<1x128xf32>
    %6 = vector.broadcast %5 : vector<1x128xf32> to vector<128x128xf32>
    %7 = arith.addf %4, %6 : vector<128x128xf32>
    %cst_8 = arith.constant 0.000000e+00 : f32
    %8 = vector.broadcast %cst_8 : f32 to vector<128x128xf32>
    %9 = arith.maximumf %7, %8 : vector<128x128xf32>
    %c0_9 = arith.constant 0 : index
    %c0_10 = arith.constant 0 : index
    %10 = vector.load %arg6[%c0_9, %c0_10] : memref<128x128xf32, #tpu.memory_space<vmem>>, vector<128x128xf32>
    %cst_11 = arith.constant dense<0.000000e+00> : vector<128x128xf32>
    %11 = tpu.matmul %9, %10, %cst_11 {dimension_numbers = #tpu.dot_dimension_numbers<[1], [0], [0], [1], [0, 0, 1, 1], [], []>} : vector<128x128xf32>, vector<128x128xf32>, vector<128x128xf32> -> vector<128x128xf32>
    %cst_12 = arith.constant dense<0.000000e+00> : vector<128x128xf32>
    %12 = tpu.matmul %0, %11, %cst_12 {dimension_numbers = #tpu.dot_dimension_numbers<[1], [0], [0], [1], [0, 0, 1, 1], [], []>} : vector<128x128xf32>, vector<128x128xf32>, vector<128x128xf32> -> vector<128x128xf32>
    %c0_13 = arith.constant 0 : index
    %c0_14 = arith.constant 0 : index
    %13 = vector.load %arg7[%c0_13, %c0_14] : memref<1x128xf32, #tpu.memory_space<vmem>>, vector<1x128xf32>
    %14 = vector.broadcast %13 : vector<1x128xf32> to vector<128x128xf32>
    %15 = arith.addf %12, %14 : vector<128x128xf32>
    %cst_15 = arith.constant 0.000000e+00 : f32
    %16 = vector.broadcast %cst_15 : f32 to vector<128x128xf32>
    %17 = arith.maximumf %15, %16 : vector<128x128xf32>
    %c0_16 = arith.constant 0 : index
    %c0_17 = arith.constant 0 : index
    %18 = vector.load %arg2[%c0_16, %c0_17] : memref<8x128xf32, #tpu.memory_space<vmem>>, vector<8x128xf32>
    %cst_18 = arith.constant dense<0.000000e+00> : vector<8x128xf32>
    %19 = tpu.matmul %18, %17, %cst_18 {dimension_numbers = #tpu.dot_dimension_numbers<[1], [0], [0], [1], [0, 0, 1, 1], [], []>} : vector<8x128xf32>, vector<128x128xf32>, vector<8x128xf32> -> vector<8x128xf32>
    %c0_19 = arith.constant 0 : index
    %c0_20 = arith.constant 0 : index
    %20 = vector.load %arg8[%c0_19, %c0_20] : memref<128x128xf32, #tpu.memory_space<vmem>>, vector<128x128xf32>
    %cst_21 = arith.constant dense<0.000000e+00> : vector<8x128xf32>
    %21 = tpu.matmul %19, %20, %cst_21 {dimension_numbers = #tpu.dot_dimension_numbers<[1], [0], [0], [1], [0, 0, 1, 1], [], []>} : vector<8x128xf32>, vector<128x128xf32>, vector<8x128xf32> -> vector<8x128xf32>
    %c0_22 = arith.constant 0 : index
    %c0_23 = arith.constant 0 : index
    %22 = vector.load %arg9[%c0_22, %c0_23] : memref<1x128xf32, #tpu.memory_space<vmem>>, vector<1x128xf32>
    %23 = vector.broadcast %22 : vector<1x128xf32> to vector<8x128xf32>
    %24 = arith.addf %21, %23 : vector<8x128xf32>
    %c0_24 = arith.constant 0 : index
    %c0_25 = arith.constant 0 : index
    %25 = vector.load %arg10[%c0_24, %c0_25] : memref<8x128xf32, #tpu.memory_space<vmem>>, vector<8x128xf32>
    tpu.vector_store %arg10[%c0_24, %c0_25], %24 {strides = array<i32>} : memref<8x128xf32, #tpu.memory_space<vmem>>, vector<8x128xf32>,
    return
  }
  func.func @transform_0(%arg0: i32) -> (i32, i32) {
    %c0_i32 = arith.constant 0 : i32
    %c0_i32_0 = arith.constant 0 : i32
    %c0_i32_1 = arith.constant 0 : i32
    return %c0_i32, %c0_i32_0 : i32, i32
  }
  func.func @transform_1(%arg0: i32) -> (i32, i32) {
    %c0_i32 = arith.constant 0 : i32
    %c0_i32_0 = arith.constant 0 : i32
    %c0_i32_1 = arith.constant 0 : i32
    return %c0_i32, %c0_i32_0 : i32, i32
  }
  func.func @transform_2(%arg0: i32) -> (i32, i32) {
    %c0_i32 = arith.constant 0 : i32
    %c0_i32_0 = arith.constant 0 : i32
    %c0_i32_1 = arith.constant 0 : i32
    return %c0_i32, %c0_i32_0 : i32, i32
  }
  func.func @transform_3(%arg0: i32) -> (i32, i32) {
    %c0_i32 = arith.constant 0 : i32
    %c0_i32_0 = arith.constant 0 : i32
    %c0_i32_1 = arith.constant 0 : i32
    return %c0_i32, %c0_i32_0 : i32, i32
  }
  func.func @transform_4(%arg0: i32) -> (i32, i32) {
    %c0_i32 = arith.constant 0 : i32
    %c0_i32_0 = arith.constant 0 : i32
    %c0_i32_1 = arith.constant 0 : i32
    return %c0_i32, %c0_i32_0 : i32, i32
  }
  func.func @transform_5(%arg0: i32) -> (i32, i32) {
    %c0_i32 = arith.constant 0 : i32
    %c0_i32_0 = arith.constant 0 : i32
    %c0_i32_1 = arith.constant 0 : i32
    return %c0_i32, %c0_i32_0 : i32, i32
  }
  func.func @transform_6(%arg0: i32) -> (i32, i32) {
    %c0_i32 = arith.constant 0 : i32
    %c0_i32_0 = arith.constant 0 : i32
    %c0_i32_1 = arith.constant 0 : i32
    return %c0_i32, %c0_i32_0 : i32, i32
  }
  func.func @transform_7(%arg0: i32) -> (i32, i32) {
    %c0_i32 = arith.constant 0 : i32
    %c0_i32_0 = arith.constant 0 : i32
    %c0_i32_1 = arith.constant 0 : i32
    return %c0_i32, %c0_i32_0 : i32, i32
  }
  func.func @transform_8(%arg0: i32) -> (i32, i32) {
    %c0_i32 = arith.constant 0 : i32
    %c0_i32_0 = arith.constant 0 : i32
    %c0_i32_1 = arith.constant 0 : i32
    return %c0_i32, %c0_i32_0 : i32, i32
  }
  func.func @transform_9(%arg0: i32) -> (i32, i32) {
    %c0_i32 = arith.constant 0 : i32
    %c0_i32_0 = arith.constant 0 : i32
    %c0_i32_1 = arith.constant 0 : i32
    return %c0_i32, %c0_i32_0 : i32, i32
  }
}

</mosaic_0001>

<llo_original>
// kernel: tpu_custom_call.1
$region0: #{tpu_custom_call.1}
  #allocation0 [shape = 'u32[]', space=smem, size = 0x4, offset = 0x4, fixed_abs, tag = 'smem constant byte address 0x4 - core index']
  #allocation1 [shape = 'u32[72,128]{1,0:T(1,128)}', space=vmem, size = 0x9000, scoped, tag = 'internal scratch']
  %s0 = inlined_call_operand.hbm [shape: f32[128,128], index: 0, kind: input, shape index: {}]
  %s1 = inlined_call_operand.hbm [shape: f32[8,128], index: 1, kind: input, shape index: {}]
  %s2 = inlined_call_operand.hbm [shape: f32[128,128], index: 2, kind: input, shape index: {}]
  %s3 = inlined_call_operand.hbm [shape: f32[128,128], index: 3, kind: input, shape index: {}]
  %s4 = inlined_call_operand.vmem [shape: f32[1,128], index: 4, kind: input, shape index: {}]
  %s5 = inlined_call_operand.hbm [shape: f32[128,128], index: 5, kind: input, shape index: {}]
  %s6 = inlined_call_operand.vmem [shape: f32[1,128], index: 6, kind: input, shape index: {}]
  %s7 = inlined_call_operand.hbm [shape: f32[128,128], index: 7, kind: input, shape index: {}]
  %s8 = inlined_call_operand.vmem [shape: f32[1,128], index: 8, kind: input, shape index: {}]
  %s9 = inlined_call_operand.hbm [shape: f32[8,128], index: 9, kind: output, shape index: {}]
  %s10 = sld [smem:[#allocation0]]
  $region70: #{tpu_custom_call.1} parent=0
    _
  %s12 = ssub.s32 1, %s10
  %s13 = scalar_select 0, %s12, %s10
  $region1: #{tpu_custom_call.1} parent=0
    #allocation2 [shape = 'u8[65536]{0}', space=vmem, size = 0x10000, scoped, tag = 'input window, operand 0, single buffered']
    #allocation3 [shape = 's32[1]{0}', space=sflag, size = 0x4, scoped, tag = 'scoped memory for tpu_custom_call.1']
    #allocation4 [shape = 's32[1]{0}', space=sflag, size = 0x4, scoped, tag = 'scoped memory for tpu_custom_call.1']
    #allocation5 [shape = 'u8[4096]{0}', space=vmem, size = 0x1000, scoped, tag = 'input window, operand 1, single buffered']
    #allocation6 [shape = 's32[1]{0}', space=sflag, size = 0x4, scoped, tag = 'scoped memory for tpu_custom_call.1']
    #allocation7 [shape = 'u8[65536]{0}', space=vmem, size = 0x10000, scoped, tag = 'input window, operand 2, single buffered']
    #allocation8 [shape = 'u8[65536]{0}', space=vmem, size = 0x10000, scoped, tag = 'input window, operand 3, single buffered']
    #allocation9 [shape = 's32[1]{0}', space=sflag, size = 0x4, scoped, tag = 'scoped memory for tpu_custom_call.1']
    #allocation10 [shape = 'u8[65536]{0}', space=vmem, size = 0x10000, scoped, tag = 'input window, operand 5, single buffered']
    #allocation11 [shape = 'u8[65536]{0}', space=vmem, size = 0x10000, scoped, tag = 'input window, operand 7, single buffered']
    #allocation12 [shape = 's32[1]{0}', space=sflag, size = 0x4, scoped, tag = 'scoped memory for tpu_custom_call.1']
    #allocation13 [shape = 'u8[4096]{0}', space=vmem, size = 0x1000, scoped, tag = 'output window, operand 0, single buffered']
    %14 = vsyncpa [#allocation3], 0
    %15 = vsyncpa [#allocation6], 0
    %16 = vsyncpa [#allocation9], 0
    %17 = vsyncpa [#allocation12], 0
    %18 = vsyncpa [#allocation4], 0
    // Predicated region
    $region2: #{tpu_custom_call.1} parent=1 // pred_check
      _
    $region3: #{tpu_custom_call.1} parent=1 // pred_check_branch
      %20 = sbr.rel (0) target = $region5
    $region4: #{tpu_custom_call.1} parent=1 // pred_region
      %22 = vsyncadd [#allocation3], 0
      %s23 = sshll.u32 %s0, 4
      %s24 = int_to_ptr.hbm [resolvable:$true] %s23
      %s25 = sshll.u32 [#allocation2], 4
      %s26 = int_to_ptr.vmem [resolvable:$true] %s25
      %31 = dma.hbm_to_vmem [thread:$0]  %s24, 2048, %s26, [#allocation3], 128, 128, 8
    $region5: #{tpu_custom_call.1} parent=1 // pred_fallthru
      _
    // Predicated region
    $region6: #{tpu_custom_call.1} parent=1 // pred_check
      _
    $region7: #{tpu_custom_call.1} parent=1 // pred_check_branch
      %33 = sbr.rel (0) target = $region9
    $region8: #{tpu_custom_call.1} parent=1 // pred_region
      %35 = vsyncadd [#allocation6], 0
      %s37 = sshll.u32 %s1, 4
      %s38 = int_to_ptr.hbm [resolvable:$true] %s37
      %s39 = sshll.u32 [#allocation5], 4
      %s40 = int_to_ptr.vmem [resolvable:$true] %s39
      %42 = dma.hbm_to_vmem [thread:$0]  %s38, 128, %s40, [#allocation6]
    $region9: #{tpu_custom_call.1} parent=1 // pred_fallthru
      _
    // Predicated region
    $region10: #{tpu_custom_call.1} parent=1 // pred_check
      _
    $region11: #{tpu_custom_call.1} parent=1 // pred_check_branch
      %44 = sbr.rel (0) target = $region13
    $region12: #{tpu_custom_call.1} parent=1 // pred_region
      %46 = vsyncadd [#allocation6], 0
      %s47 = sshll.u32 %s2, 4
      %s48 = int_to_ptr.hbm [resolvable:$true] %s47
      %s49 = sshll.u32 [#allocation7], 4
      %s50 = int_to_ptr.vmem [resolvable:$true] %s49
      %55 = dma.hbm_to_vmem [thread:$0]  %s48, 2048, %s50, [#allocation6], 128, 128, 8
    $region13: #{tpu_custom_call.1} parent=1 // pred_fallthru
      _
    // Predicated region
    $region14: #{tpu_custom_call.1} parent=1 // pred_check
      _
    $region15: #{tpu_custom_call.1} parent=1 // pred_check_branch
      %57 = sbr.rel (0) target = $region17
    $region16: #{tpu_custom_call.1} parent=1 // pred_region
      %59 = vsyncadd [#allocation9], 0
      %s60 = sshll.u32 %s3, 4
      %s61 = int_to_ptr.hbm [resolvable:$true] %s60
      %s62 = sshll.u32 [#allocation8], 4
      %s63 = int_to_ptr.vmem [resolvable:$true] %s62
      %68 = dma.hbm_to_vmem [thread:$0]  %s61, 2048, %s63, [#allocation9], 128, 128, 8
    $region17: #{tpu_custom_call.1} parent=1 // pred_fallthru
      _
    // Predicated region
    $region18: #{tpu_custom_call.1} parent=1 // pred_check
      _
    $region19: #{tpu_custom_call.1} parent=1 // pred_check_branch
      %70 = sbr.rel (0) target = $region21
    $region20: #{tpu_custom_call.1} parent=1 // pred_region
      _
    $region21: #{tpu_custom_call.1} parent=1 // pred_fallthru
      _
    // Predicated region
    $region22: #{tpu_custom_call.1} parent=1 // pred_check
      _
    $region23: #{tpu_custom_call.1} parent=1 // pred_check_branch
      %72 = sbr.rel (0) target = $region25
    $region24: #{tpu_custom_call.1} parent=1 // pred_region
      %74 = vsyncadd [#allocation9], 0
      %s75 = sshll.u32 %s5, 4
      %s76 = int_to_ptr.hbm [resolvable:$true] %s75
      %s77 = sshll.u32 [#allocation10], 4
      %s78 = int_to_ptr.vmem [resolvable:$true] %s77
      %83 = dma.hbm_to_vmem [thread:$0]  %s76, 2048, %s78, [#allocation9], 128, 128, 8
    $region25: #{tpu_custom_call.1} parent=1 // pred_fallthru
      _
    // Predicated region
    $region26: #{tpu_custom_call.1} parent=1 // pred_check
      _
    $region27: #{tpu_custom_call.1} parent=1 // pred_check_branch
      %85 = sbr.rel (0) target = $region29
    $region28: #{tpu_custom_call.1} parent=1 // pred_region
      _
    $region29: #{tpu_custom_call.1} parent=1 // pred_fallthru
      _
    // Predicated region
    $region30: #{tpu_custom_call.1} parent=1 // pred_check
      _
    $region31: #{tpu_custom_call.1} parent=1 // pred_check_branch
      %87 = sbr.rel (0) target = $region33
    $region32: #{tpu_custom_call.1} parent=1 // pred_region
      %89 = vsyncadd [#allocation12], 0
      %s90 = sshll.u32 %s7, 4
      %s91 = int_to_ptr.hbm [resolvable:$true] %s90
      %s92 = sshll.u32 [#allocation11], 4
      %s93 = int_to_ptr.vmem [resolvable:$true] %s92
      %98 = dma.hbm_to_vmem [thread:$0]  %s91, 2048, %s93, [#allocation12], 128, 128, 8
    $region33: #{tpu_custom_call.1} parent=1 // pred_fallthru
      _
    // Predicated region
    $region34: #{tpu_custom_call.1} parent=1 // pred_check
      _
    $region35: #{tpu_custom_call.1} parent=1 // pred_check_branch
      %100 = sbr.rel (0) target = $region37
    $region36: #{tpu_custom_call.1} parent=1 // pred_region
      _
    $region37: #{tpu_custom_call.1} parent=1 // pred_fallthru
      _
    // Predicated region
    $region38: #{tpu_custom_call.1} parent=1 // pred_check
      _
    $region39: #{tpu_custom_call.1} parent=1 // pred_check_branch
      %102 = sbr.rel (0) target = $region41
    $region40: #{tpu_custom_call.1} parent=1 // pred_region
      %104 = dma.done [#allocation3], 2048
    $region41: #{tpu_custom_call.1} parent=1 // pred_fallthru
      _
    // Predicated region
    $region42: #{tpu_custom_call.1} parent=1 // pred_check
      _
    $region43: #{tpu_custom_call.1} parent=1 // pred_check_branch
      %106 = sbr.rel (0) target = $region45
    $region44: #{tpu_custom_call.1} parent=1 // pred_region
      %108 = dma.done [#allocation6], 128
    $region45: #{tpu_custom_call.1} parent=1 // pred_fallthru
      _
    // Predicated region
    $region46: #{tpu_custom_call.1} parent=1 // pred_check
      _
    $region47: #{tpu_custom_call.1} parent=1 // pred_check_branch
      %110 = sbr.rel (0) target = $region49
    $region48: #{tpu_custom_call.1} parent=1 // pred_region
      %112 = dma.done [#allocation6], 2048
    $region49: #{tpu_custom_call.1} parent=1 // pred_fallthru
      _
    // Predicated region
    $region50: #{tpu_custom_call.1} parent=1 // pred_check
      _
    $region51: #{tpu_custom_call.1} parent=1 // pred_check_branch
      %114 = sbr.rel (0) target = $region53
    $region52: #{tpu_custom_call.1} parent=1 // pred_region
      %116 = dma.done [#allocation9], 2048
    $region53: #{tpu_custom_call.1} parent=1 // pred_fallthru
      _
    // Predicated region
    $region54: #{tpu_custom_call.1} parent=1 // pred_check
      _
    $region55: #{tpu_custom_call.1} parent=1 // pred_check_branch
      %118 = sbr.rel (0) target = $region57
    $region56: #{tpu_custom_call.1} parent=1 // pred_region
      %120 = dma.done [#allocation9], 2048
    $region57: #{tpu_custom_call.1} parent=1 // pred_fallthru
      _
    // Predicated region
    $region58: #{tpu_custom_call.1} parent=1 // pred_check
      _
    $region59: #{tpu_custom_call.1} parent=1 // pred_check_branch
      %122 = sbr.rel (0) target = $region61
    $region60: #{tpu_custom_call.1} parent=1 // pred_region
      %124 = dma.done [#allocation12], 2048
    $region61: #{tpu_custom_call.1} parent=1 // pred_fallthru
      _
    %v125 = vld [vmem:[#allocation2] sm:$0xff]
    %v126 = vld [vmem:[#allocation2 + $0x8] sm:$0xff]
    %v127 = vld [vmem:[#allocation2 + $0x10] sm:$0xff]
    %v128 = vld [vmem:[#allocation2 + $0x18] sm:$0xff]
    %v129 = vld [vmem:[#allocation2 + $0x20] sm:$0xff]
    %v130 = vld [vmem:[#allocation2 + $0x28] sm:$0xff]
    %v131 = vld [vmem:[#allocation2 + $0x30] sm:$0xff]
    %v132 = vld [vmem:[#allocation2 + $0x38] sm:$0xff]
    %v133 = vld [vmem:[#allocation2 + $0x40] sm:$0xff]
    %v134 = vld [vmem:[#allocation2 + $0x48] sm:$0xff]
    %v135 = vld [vmem:[#allocation2 + $0x50] sm:$0xff]
    %v136 = vld [vmem:[#allocation2 + $0x58] sm:$0xff]
    %v137 = vld [vmem:[#allocation2 + $0x60] sm:$0xff]
    %v138 = vld [vmem:[#allocation2 + $0x68] sm:$0xff]
    %v139 = vld [vmem:[#allocation2 + $0x70] sm:$0xff]
    %v140 = vld [vmem:[#allocation2 + $0x78] sm:$0xff]
    %v141 = vld [vmem:[#allocation7] sm:$0xff]
    %v142 = vld [vmem:[#allocation7 + $0x8] sm:$0xff]
    %v143 = vld [vmem:[#allocation7 + $0x10] sm:$0xff]
    %v144 = vld [vmem:[#allocation7 + $0x18] sm:$0xff]
    %v145 = vld [vmem:[#allocation7 + $0x20] sm:$0xff]
    %v146 = vld [vmem:[#allocation7 + $0x28] sm:$0xff]
    %v147 = vld [vmem:[#allocation7 + $0x30] sm:$0xff]
    %v148 = vld [vmem:[#allocation7 + $0x38] sm:$0xff]
    %v149 = vld [vmem:[#allocation7 + $0x40] sm:$0xff]
    %v150 = vld [vmem:[#allocation7 + $0x48] sm:$0xff]
    %v151 = vld [vmem:[#allocation7 + $0x50] sm:$0xff]
    %v152 = vld [vmem:[#allocation7 + $0x58] sm:$0xff]
    %v153 = vld [vmem:[#allocation7 + $0x60] sm:$0xff]
    %v154 = vld [vmem:[#allocation7 + $0x68] sm:$0xff]
    %v155 = vld [vmem:[#allocation7 + $0x70] sm:$0xff]
    %v156 = vld [vmem:[#allocation7 + $0x78] sm:$0xff]
    %157 = vmatpush.msra.mxu0 %v156
    %158 = vmatpush.msra.mxu0 %v155
    %159 = vmatpush.msra.mxu0 %v154
    %160 = vmatpush.msra.mxu0 %v153
    %161 = vmatpush.msra.mxu0 %v152
    %162 = vmatpush.msra.mxu0 %v151
    %163 = vmatpush.msra.mxu0 %v150
    %164 = vmatpush.msra.mxu0 %v149
    %165 = vmatpush.msra.mxu0 %v148
    %166 = vmatpush.msra.mxu0 %v147
    %167 = vmatpush.msra.mxu0 %v146
    %168 = vmatpush.msra.mxu0 %v145
    %169 = vmatpush.msra.mxu0 %v144
    %170 = vmatpush.msra.mxu0 %v143
    %171 = vmatpush.msra.mxu0 %v142
    %172 = vmatpush.msra.mxu0 %v141
    %173 = vmatmul.f32.gmra.mxu0 %v125
    %v174 = vpop.f32.mrf.mxu0
    %v175 = vadd.f32 0.0, %v174
    %176 = vmatmul.f32.gmra.mxu0 %v126
    %v177 = vpop.f32.mrf.mxu0
    %v178 = vadd.f32 0.0, %v177
    %179 = vmatmul.f32.gmra.mxu0 %v127
    %v180 = vpop.f32.mrf.mxu0
    %v181 = vadd.f32 0.0, %v180
    %182 = vmatmul.f32.gmra.mxu0 %v128
    %v183 = vpop.f32.mrf.mxu0
    %v184 = vadd.f32 0.0, %v183
    %185 = vmatmul.f32.gmra.mxu0 %v129
    %v186 = vpop.f32.mrf.mxu0
    %v187 = vadd.f32 0.0, %v186
    %188 = vmatmul.f32.gmra.mxu0 %v130
    %v189 = vpop.f32.mrf.mxu0
    %v190 = vadd.f32 0.0, %v189
    %191 = vmatmul.f32.gmra.mxu0 %v131
    %v192 = vpop.f32.mrf.mxu0
    %v193 = vadd.f32 0.0, %v192
    %194 = vmatmul.f32.gmra.mxu0 %v132
    %v195 = vpop.f32.mrf.mxu0
    %v196 = vadd.f32 0.0, %v195
    %197 = vmatmul.f32.gmra.mxu0 %v133
    %v198 = vpop.f32.mrf.mxu0
    %v199 = vadd.f32 0.0, %v198
    %200 = vmatmul.f32.gmra.mxu0 %v134
    %v201 = vpop.f32.mrf.mxu0
    %v202 = vadd.f32 0.0, %v201
    %203 = vmatmul.f32.gmra.mxu0 %v135
    %v204 = vpop.f32.mrf.mxu0
    %v205 = vadd.f32 0.0, %v204
    %206 = vmatmul.f32.gmra.mxu0 %v136
    %v207 = vpop.f32.mrf.mxu0
    %v208 = vadd.f32 0.0, %v207
    %209 = vmatmul.f32.gmra.mxu0 %v137
    %v210 = vpop.f32.mrf.mxu0
    %v211 = vadd.f32 0.0, %v210
    %212 = vmatmul.f32.gmra.mxu0 %v138
    %v213 = vpop.f32.mrf.mxu0
    %v214 = vadd.f32 0.0, %v213
    %215 = vmatmul.f32.gmra.mxu0 %v139
    %v216 = vpop.f32.mrf.mxu0
    %v217 = vadd.f32 0.0, %v216
    %218 = vmatmul.f32.gmra.mxu0 %v140
    %v219 = vpop.f32.mrf.mxu0
    %v220 = vadd.f32 0.0, %v219
    %221 = vdwg.mxu0
    %v222 = vld [vmem:[#allocation8] sm:$0xff]
    %v223 = vld [vmem:[#allocation8 + $0x8] sm:$0xff]
    %v224 = vld [vmem:[#allocation8 + $0x10] sm:$0xff]
    %v225 = vld [vmem:[#allocation8 + $0x18] sm:$0xff]
    %v226 = vld [vmem:[#allocation8 + $0x20] sm:$0xff]
    %v227 = vld [vmem:[#allocation8 + $0x28] sm:$0xff]
    %v228 = vld [vmem:[#allocation8 + $0x30] sm:$0xff]
    %v229 = vld [vmem:[#allocation8 + $0x38] sm:$0xff]
    %v230 = vld [vmem:[#allocation8 + $0x40] sm:$0xff]
    %v231 = vld [vmem:[#allocation8 + $0x48] sm:$0xff]
    %v232 = vld [vmem:[#allocation8 + $0x50] sm:$0xff]
    %v233 = vld [vmem:[#allocation8 + $0x58] sm:$0xff]
    %v234 = vld [vmem:[#allocation8 + $0x60] sm:$0xff]
    %v235 = vld [vmem:[#allocation8 + $0x68] sm:$0xff]
    %v236 = vld [vmem:[#allocation8 + $0x70] sm:$0xff]
    %v237 = vld [vmem:[#allocation8 + $0x78] sm:$0xff]
    %v238 = vld [vmem:[%s4] sm:$0x1]
    %v240 = vperm.slane %v238, 0
    %242 = vmatpush.msra.mxu0 %v237
    %243 = vmatpush.msra.mxu0 %v236
    %244 = vmatpush.msra.mxu0 %v235
    %245 = vmatpush.msra.mxu0 %v234
    %246 = vmatpush.msra.mxu0 %v233
    %247 = vmatpush.msra.mxu0 %v232
    %248 = vmatpush.msra.mxu0 %v231
    %249 = vmatpush.msra.mxu0 %v230
    %250 = vmatpush.msra.mxu0 %v229
    %251 = vmatpush.msra.mxu0 %v228
    %252 = vmatpush.msra.mxu0 %v227
    %253 = vmatpush.msra.mxu0 %v226
    %254 = vmatpush.msra.mxu0 %v225
    %255 = vmatpush.msra.mxu0 %v224
    %256 = vmatpush.msra.mxu0 %v223
    %257 = vmatpush.msra.mxu0 %v222
    %258 = vmatmul.f32.gmra.mxu0 %v175
    %v259 = vpop.f32.mrf.mxu0
    %v260 = vadd.f32 %v240, %v259
    %261 = vmatmul.f32.gmra.mxu0 %v178
    %v262 = vpop.f32.mrf.mxu0
    %v263 = vadd.f32 %v240, %v262
    %264 = vmatmul.f32.gmra.mxu0 %v181
    %v265 = vpop.f32.mrf.mxu0
    %v266 = vadd.f32 %v240, %v265
    %267 = vmatmul.f32.gmra.mxu0 %v184
    %v268 = vpop.f32.mrf.mxu0
    %v269 = vadd.f32 %v240, %v268
    %270 = vmatmul.f32.gmra.mxu0 %v187
    %v271 = vpop.f32.mrf.mxu0
    %v272 = vadd.f32 %v240, %v271
    %273 = vmatmul.f32.gmra.mxu0 %v190
    %v274 = vpop.f32.mrf.mxu0
    %v275 = vadd.f32 %v240, %v274
    %276 = vmatmul.f32.gmra.mxu0 %v193
    %v277 = vpop.f32.mrf.mxu0
    %v278 = vadd.f32 %v240, %v277
    %279 = vmatmul.f32.gmra.mxu0 %v196
    %v280 = vpop.f32.mrf.mxu0
    %v281 = vadd.f32 %v240, %v280
    %282 = vmatmul.f32.gmra.mxu0 %v199
    %v283 = vpop.f32.mrf.mxu0
    %v284 = vadd.f32 %v240, %v283
    %285 = vmatmul.f32.gmra.mxu0 %v202
    %v286 = vpop.f32.mrf.mxu0
    %v287 = vadd.f32 %v240, %v286
    %288 = vmatmul.f32.gmra.mxu0 %v205
    %v289 = vpop.f32.mrf.mxu0
    %v290 = vadd.f32 %v240, %v289
    %291 = vmatmul.f32.gmra.mxu0 %v208
    %v292 = vpop.f32.mrf.mxu0
    %v293 = vadd.f32 %v240, %v292
    %294 = vmatmul.f32.gmra.mxu0 %v211
    %v295 = vpop.f32.mrf.mxu0
    %v296 = vadd.f32 %v240, %v295
    %297 = vmatmul.f32.gmra.mxu0 %v214
    %v298 = vpop.f32.mrf.mxu0
    %v299 = vadd.f32 %v240, %v298
    %300 = vmatmul.f32.gmra.mxu0 %v217
    %v301 = vpop.f32.mrf.mxu0
    %v302 = vadd.f32 %v240, %v301
    %303 = vmatmul.f32.gmra.mxu0 %v220
    %v304 = vpop.f32.mrf.mxu0
    %v305 = vadd.f32 %v240, %v304
    %306 = vdwg.mxu0
    %v307 = vmax.f32 %v260, 0.0
    %v308 = vmax.f32 %v263, 0.0
    %v309 = vmax.f32 %v266, 0.0
    %v310 = vmax.f32 %v269, 0.0
    %v311 = vmax.f32 %v272, 0.0
    %v312 = vmax.f32 %v275, 0.0
    %v313 = vmax.f32 %v278, 0.0
    %v314 = vmax.f32 %v281, 0.0
    %v315 = vmax.f32 %v284, 0.0
    %v316 = vmax.f32 %v287, 0.0
    %v317 = vmax.f32 %v290, 0.0
    %v318 = vmax.f32 %v293, 0.0
    %v319 = vmax.f32 %v296, 0.0
    %v320 = vmax.f32 %v299, 0.0
    %v321 = vmax.f32 %v302, 0.0
    %v322 = vmax.f32 %v305, 0.0
    %v323 = vld [vmem:[#allocation10] sm:$0xff]
    %v324 = vld [vmem:[#allocation10 + $0x8] sm:$0xff]
    %v325 = vld [vmem:[#allocation10 + $0x10] sm:$0xff]
    %v326 = vld [vmem:[#allocation10 + $0x18] sm:$0xff]
    %v327 = vld [vmem:[#allocation10 + $0x20] sm:$0xff]
    %v328 = vld [vmem:[#allocation10 + $0x28] sm:$0xff]
    %v329 = vld [vmem:[#allocation10 + $0x30] sm:$0xff]
    %v330 = vld [vmem:[#allocation10 + $0x38] sm:$0xff]
    %v331 = vld [vmem:[#allocation10 + $0x40] sm:$0xff]
    %v332 = vld [vmem:[#allocation10 + $0x48] sm:$0xff]
    %v333 = vld [vmem:[#allocation10 + $0x50] sm:$0xff]
    %v334 = vld [vmem:[#allocation10 + $0x58] sm:$0xff]
    %v335 = vld [vmem:[#allocation10 + $0x60] sm:$0xff]
    %v336 = vld [vmem:[#allocation10 + $0x68] sm:$0xff]
    %v337 = vld [vmem:[#allocation10 + $0x70] sm:$0xff]
    %v338 = vld [vmem:[#allocation10 + $0x78] sm:$0xff]
    %339 = vmatpush.msra.mxu0 %v338
    %340 = vmatpush.msra.mxu0 %v337
    %341 = vmatpush.msra.mxu0 %v336
    %342 = vmatpush.msra.mxu0 %v335
    %343 = vmatpush.msra.mxu0 %v334
    %344 = vmatpush.msra.mxu0 %v333
    %345 = vmatpush.msra.mxu0 %v332
    %346 = vmatpush.msra.mxu0 %v331
    %347 = vmatpush.msra.mxu0 %v330
    %348 = vmatpush.msra.mxu0 %v329
    %349 = vmatpush.msra.mxu0 %v328
    %350 = vmatpush.msra.mxu0 %v327
    %351 = vmatpush.msra.mxu0 %v326
    %352 = vmatpush.msra.mxu0 %v325
    %353 = vmatpush.msra.mxu0 %v324
    %354 = vmatpush.msra.mxu0 %v323
    %355 = vmatmul.f32.gmra.mxu0 %v307
    %v356 = vpop.f32.mrf.mxu0
    %v357 = vadd.f32 0.0, %v356
    %358 = vmatmul.f32.gmra.mxu0 %v308
    %v359 = vpop.f32.mrf.mxu0
    %v360 = vadd.f32 0.0, %v359
    %361 = vmatmul.f32.gmra.mxu0 %v309
    %v362 = vpop.f32.mrf.mxu0
    %v363 = vadd.f32 0.0, %v362
    %364 = vmatmul.f32.gmra.mxu0 %v310
    %v365 = vpop.f32.mrf.mxu0
    %v366 = vadd.f32 0.0, %v365
    %367 = vmatmul.f32.gmra.mxu0 %v311
    %v368 = vpop.f32.mrf.mxu0
    %v369 = vadd.f32 0.0, %v368
    %370 = vmatmul.f32.gmra.mxu0 %v312
    %v371 = vpop.f32.mrf.mxu0
    %v372 = vadd.f32 0.0, %v371
    %373 = vmatmul.f32.gmra.mxu0 %v313
    %v374 = vpop.f32.mrf.mxu0
    %v375 = vadd.f32 0.0, %v374
    %376 = vmatmul.f32.gmra.mxu0 %v314
    %v377 = vpop.f32.mrf.mxu0
    %v378 = vadd.f32 0.0, %v377
    %379 = vmatmul.f32.gmra.mxu0 %v315
    %v380 = vpop.f32.mrf.mxu0
    %v381 = vadd.f32 0.0, %v380
    %382 = vmatmul.f32.gmra.mxu0 %v316
    %v383 = vpop.f32.mrf.mxu0
    %v384 = vadd.f32 0.0, %v383
    %385 = vmatmul.f32.gmra.mxu0 %v317
    %v386 = vpop.f32.mrf.mxu0
    %v387 = vadd.f32 0.0, %v386
    %388 = vmatmul.f32.gmra.mxu0 %v318
    %v389 = vpop.f32.mrf.mxu0
    %v390 = vadd.f32 0.0, %v389
    %391 = vmatmul.f32.gmra.mxu0 %v319
    %v392 = vpop.f32.mrf.mxu0
    %v393 = vadd.f32 0.0, %v392
    %394 = vmatmul.f32.gmra.mxu0 %v320
    %v395 = vpop.f32.mrf.mxu0
    %v396 = vadd.f32 0.0, %v395
    %397 = vmatmul.f32.gmra.mxu0 %v321
    %v398 = vpop.f32.mrf.mxu0
    %v399 = vadd.f32 0.0, %v398
    %400 = vmatmul.f32.gmra.mxu0 %v322
    %v401 = vpop.f32.mrf.mxu0
    %v402 = vadd.f32 0.0, %v401
    %403 = vdwg.mxu0
    %v404 = vld [vmem:[%s6] sm:$0x1]
    %v406 = vperm.slane %v404, 0
    %408 = vmatpush.msra.mxu0 %v402
    %409 = vmatpush.msra.mxu0 %v399
    %410 = vmatpush.msra.mxu0 %v396
    %411 = vmatpush.msra.mxu0 %v393
    %412 = vmatpush.msra.mxu0 %v390
    %413 = vmatpush.msra.mxu0 %v387
    %414 = vmatpush.msra.mxu0 %v384
    %415 = vmatpush.msra.mxu0 %v381
    %416 = vmatpush.msra.mxu0 %v378
    %417 = vmatpush.msra.mxu0 %v375
    %418 = vmatpush.msra.mxu0 %v372
    %419 = vmatpush.msra.mxu0 %v369
    %420 = vmatpush.msra.mxu0 %v366
    %421 = vmatpush.msra.mxu0 %v363
    %422 = vmatpush.msra.mxu0 %v360
    %423 = vmatpush.msra.mxu0 %v357
    %424 = vmatmul.f32.gmra.mxu0 %v125
    %v425 = vpop.f32.mrf.mxu0
    %v426 = vadd.f32 %v406, %v425
    %427 = vmatmul.f32.gmra.mxu0 %v126
    %v428 = vpop.f32.mrf.mxu0
    %v429 = vadd.f32 %v406, %v428
    %430 = vmatmul.f32.gmra.mxu0 %v127
    %v431 = vpop.f32.mrf.mxu0
    %v432 = vadd.f32 %v406, %v431
    %433 = vmatmul.f32.gmra.mxu0 %v128
    %v434 = vpop.f32.mrf.mxu0
    %v435 = vadd.f32 %v406, %v434
    %436 = vmatmul.f32.gmra.mxu0 %v129
    %v437 = vpop.f32.mrf.mxu0
    %v438 = vadd.f32 %v406, %v437
    %439 = vmatmul.f32.gmra.mxu0 %v130
    %v440 = vpop.f32.mrf.mxu0
    %v441 = vadd.f32 %v406, %v440
    %442 = vmatmul.f32.gmra.mxu0 %v131
    %v443 = vpop.f32.mrf.mxu0
    %v444 = vadd.f32 %v406, %v443
    %445 = vmatmul.f32.gmra.mxu0 %v132
    %v446 = vpop.f32.mrf.mxu0
    %v447 = vadd.f32 %v406, %v446
    %448 = vmatmul.f32.gmra.mxu0 %v133
    %v449 = vpop.f32.mrf.mxu0
    %v450 = vadd.f32 %v406, %v449
    %451 = vmatmul.f32.gmra.mxu0 %v134
    %v452 = vpop.f32.mrf.mxu0
    %v453 = vadd.f32 %v406, %v452
    %454 = vmatmul.f32.gmra.mxu0 %v135
    %v455 = vpop.f32.mrf.mxu0
    %v456 = vadd.f32 %v406, %v455
    %457 = vmatmul.f32.gmra.mxu0 %v136
    %v458 = vpop.f32.mrf.mxu0
    %v459 = vadd.f32 %v406, %v458
    %460 = vmatmul.f32.gmra.mxu0 %v137
    %v461 = vpop.f32.mrf.mxu0
    %v462 = vadd.f32 %v406, %v461
    %463 = vmatmul.f32.gmra.mxu0 %v138
    %v464 = vpop.f32.mrf.mxu0
    %v465 = vadd.f32 %v406, %v464
    %466 = vmatmul.f32.gmra.mxu0 %v139
    %v467 = vpop.f32.mrf.mxu0
    %v468 = vadd.f32 %v406, %v467
    %469 = vmatmul.f32.gmra.mxu0 %v140
    %v470 = vpop.f32.mrf.mxu0
    %v471 = vadd.f32 %v406, %v470
    %472 = vdwg.mxu0
    %v473 = vmax.f32 %v426, 0.0
    %v474 = vmax.f32 %v429, 0.0
    %v475 = vmax.f32 %v432, 0.0
    %v476 = vmax.f32 %v435, 0.0
    %v477 = vmax.f32 %v438, 0.0
    %v478 = vmax.f32 %v441, 0.0
    %v479 = vmax.f32 %v444, 0.0
    %v480 = vmax.f32 %v447, 0.0
    %v481 = vmax.f32 %v450, 0.0
    %v482 = vmax.f32 %v453, 0.0
    %v483 = vmax.f32 %v456, 0.0
    %v484 = vmax.f32 %v459, 0.0
    %v485 = vmax.f32 %v462, 0.0
    %v486 = vmax.f32 %v465, 0.0
    %v487 = vmax.f32 %v468, 0.0
    %v488 = vmax.f32 %v471, 0.0
    %v489 = vld [vmem:[#allocation5] sm:$0xff]
    %490 = vmatpush.msra.mxu0 %v488
    %491 = vmatpush.msra.mxu0 %v487
    %492 = vmatpush.msra.mxu0 %v486
    %493 = vmatpush.msra.mxu0 %v485
    %494 = vmatpush.msra.mxu0 %v484
    %495 = vmatpush.msra.mxu0 %v483
    %496 = vmatpush.msra.mxu0 %v482
    %497 = vmatpush.msra.mxu0 %v481
    %498 = vmatpush.msra.mxu0 %v480
    %499 = vmatpush.msra.mxu0 %v479
    %500 = vmatpush.msra.mxu0 %v478
    %501 = vmatpush.msra.mxu0 %v477
    %502 = vmatpush.msra.mxu0 %v476
    %503 = vmatpush.msra.mxu0 %v475
    %504 = vmatpush.msra.mxu0 %v474
    %505 = vmatpush.msra.mxu0 %v473
    %506 = vmatmul.f32.gmra.mxu0 %v489
    %v507 = vpop.f32.mrf.mxu0
    %v508 = vadd.f32 0.0, %v507
    %509 = vdwg.mxu0
    %v510 = vld [vmem:[#allocation11] sm:$0xff]
    %v511 = vld [vmem:[#allocation11 + $0x8] sm:$0xff]
    %v512 = vld [vmem:[#allocation11 + $0x10] sm:$0xff]
    %v513 = vld [vmem:[#allocation11 + $0x18] sm:$0xff]
    %v514 = vld [vmem:[#allocation11 + $0x20] sm:$0xff]
    %v515 = vld [vmem:[#allocation11 + $0x28] sm:$0xff]
    %v516 = vld [vmem:[#allocation11 + $0x30] sm:$0xff]
    %v517 = vld [vmem:[#allocation11 + $0x38] sm:$0xff]
    %v518 = vld [vmem:[#allocation11 + $0x40] sm:$0xff]
    %v519 = vld [vmem:[#allocation11 + $0x48] sm:$0xff]
    %v520 = vld [vmem:[#allocation11 + $0x50] sm:$0xff]
    %v521 = vld [vmem:[#allocation11 + $0x58] sm:$0xff]
    %v522 = vld [vmem:[#allocation11 + $0x60] sm:$0xff]
    %v523 = vld [vmem:[#allocation11 + $0x68] sm:$0xff]
    %v524 = vld [vmem:[#allocation11 + $0x70] sm:$0xff]
    %v525 = vld [vmem:[#allocation11 + $0x78] sm:$0xff]
    %v526 = vld [vmem:[%s8] sm:$0x1]
    %v528 = vperm.slane %v526, 0
    %530 = vmatpush.msra.mxu0 %v525
    %531 = vmatpush.msra.mxu0 %v524
    %532 = vmatpush.msra.mxu0 %v523
    %533 = vmatpush.msra.mxu0 %v522
    %534 = vmatpush.msra.mxu0 %v521
    %535 = vmatpush.msra.mxu0 %v520
    %536 = vmatpush.msra.mxu0 %v519
    %537 = vmatpush.msra.mxu0 %v518
    %538 = vmatpush.msra.mxu0 %v517
    %539 = vmatpush.msra.mxu0 %v516
    %540 = vmatpush.msra.mxu0 %v515
    %541 = vmatpush.msra.mxu0 %v514
    %542 = vmatpush.msra.mxu0 %v513
    %543 = vmatpush.msra.mxu0 %v512
    %544 = vmatpush.msra.mxu0 %v511
    %545 = vmatpush.msra.mxu0 %v510
    %546 = vmatmul.f32.gmra.mxu0 %v508
    %v547 = vpop.f32.mrf.mxu0
    %v548 = vadd.f32 %v528, %v547
    %549 = vdwg.mxu0
    %550 = vst [vmem:[#allocation13] sm:$0xff] %v548
    // Predicated region
    $region62: #{tpu_custom_call.1} parent=1 // pred_check
      _
    $region63: #{tpu_custom_call.1} parent=1 // pred_check_branch
      %552 = sbr.rel (0) target = $region65
    $region64: #{tpu_custom_call.1} parent=1 // pred_region
      %554 = vsyncadd [#allocation4], 0
      %s556 = sshll.u32 [#allocation13], 4
      %s557 = int_to_ptr.vmem [resolvable:$true] %s556
      %s558 = sshll.u32 %s9, 4
      %s559 = int_to_ptr.hbm [resolvable:$true] %s558
      %561 = dma.vmem_to_hbm [thread:$0]  %s557, 128, %s559, [#allocation4]
    $region65: #{tpu_custom_call.1} parent=1 // pred_fallthru
      _
    // Predicated region
    $region66: #{tpu_custom_call.1} parent=1 // pred_check
      _
    $region67: #{tpu_custom_call.1} parent=1 // pred_check_branch
      %563 = sbr.rel (0) target = $region69
    $region68: #{tpu_custom_call.1} parent=1 // pred_region
      %565 = dma.done [#allocation4], 128
    $region69: #{tpu_custom_call.1} parent=1 // pred_fallthru
      _
    %566 = vsyncpa [#allocation3], 1
    %567 = vsyncpa [#allocation6], 1
    %568 = vsyncpa [#allocation9], 1
    %569 = vsyncpa [#allocation12], 1
    %570 = vsyncpa [#allocation4], 1

</llo_original>
